<compile_context>
chip_gen: v7x
topology: tpu7x:2x2x1
jax: 0.10.0
libtpu: 0.0.40
codegen_flags: <defaults>
</compile_context>

<pallas_src>
import math
from functools import partial

import jax
import jax.numpy as jnp
from jax.experimental import pallas as pl
from jax.experimental.pallas import tpu as pltpu

_SQRT_2_OVER_PI = 0.7978845608028654


def _round_up(x, n):
    return ((x + n - 1) // n) * n


def _gelu(h, approximate):
    if approximate:
        # tanh approximation -> EUP slot; VALU stays free for bias/cast epilogue.
        return 0.5 * h * (1.0 + jnp.tanh(_SQRT_2_OVER_PI * (h + 0.044715 * (h * h * h))))
    # exact nn.GELU() semantics: erf polynomial (runs on the VALU, slower).
    return 0.5 * h * (1.0 + jax.lax.erf(h * (1.0 / math.sqrt(2.0))))


def _ffn_kernel(x_ref, w1_ref, b1_ref, w2_ref, b2_ref, o_ref, acc_ref, *,
                approximate_gelu):
    # x_ref:  (TM, Hp)        w1_ref: (TF, Hp)   b1_ref: (1, TF)
    # w2_ref: (Hp, TF)        b2_ref: (1, Hp)    o_ref:  (TM, Hp)
    # acc_ref: (TM, Hp) f32 scratch accumulator over the ffn (k) axis.
    k = pl.program_id(1)

    @pl.when(k == 0)
    def _():
        acc_ref[...] = jnp.zeros_like(acc_ref)

    x = x_ref[...]
    if x.dtype != w1_ref.dtype:          # static (trace-time) check
        x = x.astype(w1_ref.dtype)

    # layer1 tile: x @ W1[kTF:(k+1)TF, :].T  -> (TM, TF), f32 accumulation on MXU
    h = jax.lax.dot_general(
        x, w1_ref[...],
        dimension_numbers=(((1,), (1,)), ((), ())),
        preferred_element_type=jnp.float32)
    h = h + b1_ref[...]
    h = _gelu(h, approximate_gelu)

    # partial layer2: h @ W2[:, kTF:(k+1)TF].T accumulated in f32
    acc_ref[...] += jax.lax.dot_general(
        h.astype(w2_ref.dtype), w2_ref[...],
        dimension_numbers=(((1,), (1,)), ((), ())),
        preferred_element_type=jnp.float32)

    @pl.when(k == pl.num_programs(1) - 1)
    def _():
        o_ref[...] = (acc_ref[...] + b2_ref[...]).astype(o_ref.dtype)


def _vmem_capacity_bytes():
    try:
        cap = getattr(pltpu.get_tpu_info(), "vmem_capacity_bytes", None)
        if cap:
            return int(cap)
    except Exception:
        pass
    return 128 * 1024 * 1024


def _auto_tiles(mp0, hp, fp, x_bytes, w_bytes):
    """Pick (tm, tf, vmem_limit_bytes) from the chip's VMEM capacity."""
    cap = _vmem_capacity_bytes()
    # Leave headroom for compiler-internal scratch (never claim all of VMEM —
    # 64 MiB is the *entire* per-TC budget on v7x).
    vmem_limit = min(int(cap * 0.85), cap - (8 << 20))
    budget = int(vmem_limit * 0.85)

    tm = min(512, _round_up(mp0, 8))
    tf = min(1024, fp)

    def usage(tm_, tf_):
        return (2 * 2 * tf_ * hp * w_bytes           # W1/W2 tiles, double-buffered
                + 2 * 2 * tm_ * hp * x_bytes         # x and out tiles, double-buffered
                + tm_ * hp * 4                       # f32 accumulator scratch
                + 2 * (tf_ + hp) * max(x_bytes, w_bytes))  # bias tiles

    while usage(tm, tf) > budget and tf > 256:
        tf //= 2
    while usage(tm, tf) > budget and tm > 128:
        tm //= 2
    return tm, tf, vmem_limit


def _pad2(a, rows, cols):
    """Zero-pad a 2-D array to (rows, cols); no copy when already that shape."""
    if a.shape == (rows, cols):
        return a
    return jnp.zeros((rows, cols), a.dtype).at[: a.shape[0], : a.shape[1]].set(a)


def ffn_pallas(x, w1, b1, w2, b2, *, approximate_gelu=True, tm=None, tf=None):
    """Fused Linear -> GELU -> Linear.

    x:  (..., hidden)
    w1: (ffn, hidden), b1: (ffn,)     -- nn.Linear(hidden, ffn) layout
    w2: (hidden, ffn), b2: (hidden,)  -- nn.Linear(ffn, hidden) layout
    """
    orig_shape = x.shape
    hidden = orig_shape[-1]
    ffn = w1.shape[0]
    x2d = x.reshape(-1, hidden)
    m = x2d.shape[0]

    dt = x.dtype
    x_bytes = jnp.dtype(dt).itemsize
    w_bytes = jnp.dtype(w1.dtype).itemsize

    # Lane dims padded to 256 multiples: the v6e/v7x MXU is 2x256x256 and
    # 128-aligned-but-256-misaligned K/N dims leave half-filled MXU passes.
    hp = _round_up(hidden, 256)
    fp = _round_up(ffn, 256)
    mp0 = _round_up(m, 8)

    auto_tm, auto_tf, vmem_limit = _auto_tiles(mp0, hp, fp, x_bytes, w_bytes)
    tm = auto_tm if tm is None else min(_round_up(tm, 8), _round_up(mp0, 8))
    tf = auto_tf if tf is None else min(_round_up(tf, 256), fp)

    # v7x megacore: make sure the "parallel" M axis has >= 2 tiles whenever
    # there are enough rows, otherwise one of the two TensorCores sits idle.
    if mp0 > 8 and -(-mp0 // tm) < 2:
        tm = _round_up((mp0 + 1) // 2, 8)

    mp = _round_up(mp0, tm)
    fp = _round_up(fp, tf)

    # Pad to tile multiples (no-op when already aligned).  NOTE: padded token
    # rows are NOT zero after layer1 (0 @ W1 + b1 -> GELU(b1) != 0); they are
    # garbage rows that get sliced off below.  Padded hidden/ffn lanes are
    # exactly zero because the corresponding weight/bias entries are zero.
    x_p = _pad2(x2d, mp, hp)
    w1_p = _pad2(w1, fp, hp)
    b1_p = _pad2(b1.reshape(1, -1), 1, fp)
    w2_p = _pad2(w2, hp, fp)
    b2_p = _pad2(b2.reshape(1, -1), 1, hp)

    grid_i, grid_k = mp // tm, fp // tf

    cost = pl.CostEstimate(
        flops=4 * mp * hp * fp,                          # two matmuls
        transcendentals=mp * fp,                         # one tanh/erf per ffn act
        bytes_accessed=(mp * hp * x_bytes                # x read (once per row tile)
                        + grid_i * 2 * hp * fp * w_bytes  # weights re-streamed per row tile
                        + grid_i * (fp + hp) * w_bytes    # biases
                        + mp * hp * x_bytes),            # output write
    )

    # TODO(synk): on v7x, give the k-invariant x/out specs pipeline_mode=pl.Buffered(1)
    #             to reclaim VMEM, and consider fp8 weights (bf16 activations) for
    #             another ~2x MXU throughput — both gated on validation.
    out = pl.pallas_call(
        partial(_ffn_kernel, approximate_gelu=approximate_gelu),
        out_shape=jax.ShapeDtypeStruct((mp, hp), dt),
        grid_spec=pltpu.PrefetchScalarGridSpec(
            num_scalar_prefetch=0,
            grid=(grid_i, grid_k),
            in_specs=[
                pl.BlockSpec((tm, hp), lambda i, k: (i, 0)),   # x rows (k-invariant)
                pl.BlockSpec((tf, hp), lambda i, k: (k, 0)),   # W1 (ffn, hidden) tile
                pl.BlockSpec((1, tf), lambda i, k: (0, k)),    # b1 tile
                pl.BlockSpec((hp, tf), lambda i, k: (0, k)),   # W2 (hidden, ffn) tile
                pl.BlockSpec((1, hp), lambda i, k: (0, 0)),    # b2 (resident)
            ],
            out_specs=pl.BlockSpec((tm, hp), lambda i, k: (i, 0)),
            scratch_shapes=[pltpu.VMEM((tm, hp), jnp.float32)],
        ),
        compiler_params=pltpu.CompilerParams(
            dimension_semantics=("parallel", "arbitrary"),
            vmem_limit_bytes=vmem_limit,
        ),
        cost_estimate=cost,
    )(x_p, w1_p, b1_p, w2_p, b2_p)

    return out[:m, :hidden].reshape(orig_shape)


def init_ffn_params(key, hidden_size, ffn_size, dtype=jnp.float32):
    """Deterministic init mirroring nn.Linear defaults (uniform(+/- 1/sqrt(fan_in)))."""
    k1, k2, k3, k4 = jax.random.split(key, 4)
    bound1 = 1.0 / math.sqrt(hidden_size)
    bound2 = 1.0 / math.sqrt(ffn_size)
    w1 = jax.random.uniform(k1, (ffn_size, hidden_size), dtype, -bound1, bound1)
    b1 = jax.random.uniform(k2, (ffn_size,), dtype, -bound1, bound1)
    w2 = jax.random.uniform(k3, (hidden_size, ffn_size), dtype, -bound2, bound2)
    b2 = jax.random.uniform(k4, (hidden_size,), dtype, -bound2, bound2)
    return w1, b1, w2, b2


def ffn_reference(x, w1, b1, w2, b2, *, approximate_gelu=True):
    h = x @ w1.T + b1
    h = _gelu(h, approximate_gelu)
    return h @ w2.T + b2


if __name__ == "__main__":
    batch, seq, hidden_size, ffn_size = 2, 8, 32, 64

    key = jax.random.PRNGKey(0)
    kx, kp = jax.random.split(key)
    x = jax.random.normal(kx, (batch, seq, hidden_size), jnp.float32)
    w1, b1, w2, b2 = init_ffn_params(kp, hidden_size, ffn_size, jnp.float32)

    # 1) exact-erf GELU path (bit-for-bit nn.GELU() default semantics).
    out_exact = jax.block_until_ready(
        ffn_pallas(x, w1, b1, w2, b2, approximate_gelu=False))
    ref_exact = ffn_reference(x, w1, b1, w2, b2, approximate_gelu=False)
    assert out_exact.shape == (batch, seq, hidden_size)
    assert jnp.allclose(out_exact, ref_exact, atol=1e-5, rtol=1e-5)

    # 2) default tanh-approx GELU path (transcendental on the EUP).
    out_tanh = jax.block_until_ready(ffn_pallas(x, w1, b1, w2, b2))
    ref_tanh = ffn_reference(x, w1, b1, w2, b2, approximate_gelu=True)
    assert jnp.allclose(out_tanh, ref_tanh, atol=1e-5, rtol=1e-5)

    # 3) bf16 activations + weights (MXU-native on v6e/v7x), f32 accumulation.
    to_bf16 = lambda a: a.astype(jnp.bfloat16)
    out_bf16 = jax.block_until_ready(
        ffn_pallas(to_bf16(x), to_bf16(w1), to_bf16(b1), to_bf16(w2), to_bf16(b2)))
    assert out_bf16.dtype == jnp.bfloat16
    assert jnp.allclose(out_bf16.astype(jnp.float32), ref_tanh, atol=5e-2, rtol=5e-2)

    print("KERNEL_OK")
</pallas_src>

<mosaic_0001>
module attributes {stable_mosaic.version = 11 : i64} {
  func.func @_ffn_kernel(%arg0: i32, %arg1: i32, %arg2: memref<8x256xf32, #tpu.memory_space<vmem>>, %arg3: memref<256x256xf32, #tpu.memory_space<vmem>>, %arg4: memref<1x256xf32, #tpu.memory_space<vmem>>, %arg5: memref<256x256xf32, #tpu.memory_space<vmem>>, %arg6: memref<1x256xf32, #tpu.memory_space<vmem>>, %arg7: memref<8x256xf32, #tpu.memory_space<vmem>>, %arg8: memref<8x256xf32, #tpu.memory_space<vmem>>) attributes {dimension_semantics = [#tpu.dimension_semantics<parallel>, #tpu.dimension_semantics<arbitrary>], iteration_bounds = array<i64: 2, 1>, scalar_prefetch = 0 : i64, scratch_operands = 1 : i64, tpu.core_type = #tpu.core_type<tc>, window_params = [{transform_indices = @transform_0, window_bounds = array<i64: 8, 256>}, {transform_indices = @transform_1, window_bounds = array<i64: 256, 256>}, {transform_indices = @transform_2, window_bounds = array<i64: 1, 256>}, {transform_indices = @transform_3, window_bounds = array<i64: 256, 256>}, {pipeline_mode = #tpu.pipeline_mode<synchronous>, transform_indices = @transform_4, window_bounds = array<i64: 1, 256>}, {transform_indices = @transform_5, window_bounds = array<i64: 8, 256>}]} {
    %c0_i32 = arith.constant 0 : i32
    %0 = arith.cmpi eq, %arg1, %c0_i32 : i32
    %1 = arith.extui %0 : i1 to i32
    %c0_i32_0 = arith.constant 0 : i32
    %2 = arith.cmpi ne, %1, %c0_i32_0 : i32
    scf.if %2 {
      %cst_18 = arith.constant 0.000000e+00 : f32
      %25 = vector.broadcast %cst_18 : f32 to vector<8x256xf32>
      %c0_19 = arith.constant 0 : index
      %c0_20 = arith.constant 0 : index
      %26 = vector.load %arg8[%c0_19, %c0_20] : memref<8x256xf32, #tpu.memory_space<vmem>>, vector<8x256xf32>
      tpu.vector_store %arg8[%c0_19, %c0_20], %25 {strides = array<i32>} : memref<8x256xf32, #tpu.memory_space<vmem>>, vector<8x256xf32>,
    } else {
    }
    %c0 = arith.constant 0 : index
    %c0_1 = arith.constant 0 : index
    %3 = vector.load %arg2[%c0, %c0_1] : memref<8x256xf32, #tpu.memory_space<vmem>>, vector<8x256xf32>
    %c0_2 = arith.constant 0 : index
    %c0_3 = arith.constant 0 : index
    %4 = vector.load %arg3[%c0_2, %c0_3] : memref<256x256xf32, #tpu.memory_space<vmem>>, vector<256x256xf32>
    %cst = arith.constant dense<0.000000e+00> : vector<8x256xf32>
    %5 = tpu.matmul %3, %4, %cst {dimension_numbers = #tpu.dot_dimension_numbers<[1], [1], [0], [0], [0, 0, 1, 0], [], []>} : vector<8x256xf32>, vector<256x256xf32>, vector<8x256xf32> -> vector<8x256xf32>
    %c0_4 = arith.constant 0 : index
    %c0_5 = arith.constant 0 : index
    %6 = vector.load %arg4[%c0_4, %c0_5] : memref<1x256xf32, #tpu.memory_space<vmem>>, vector<1x256xf32>
    %7 = vector.broadcast %6 : vector<1x256xf32> to vector<8x256xf32>
    %8 = arith.addf %5, %7 : vector<8x256xf32>
    %cst_6 = arith.constant 5.000000e-01 : f32
    %9 = vector.broadcast %cst_6 : f32 to vector<8x256xf32>
    %10 = arith.mulf %9, %8 : vector<8x256xf32>
    %cst_7 = arith.constant 0.707106769 : f32
    %11 = vector.broadcast %cst_7 : f32 to vector<8x256xf32>
    %12 = arith.mulf %8, %11 : vector<8x256xf32>
    %13 = math.erf %12 : vector<8x256xf32>
    %cst_8 = arith.constant 1.000000e+00 : f32
    %14 = vector.broadcast %cst_8 : f32 to vector<8x256xf32>
    %15 = arith.addf %14, %13 : vector<8x256xf32>
    %16 = arith.mulf %10, %15 : vector<8x256xf32>
    %c0_9 = arith.constant 0 : index
    %c0_10 = arith.constant 0 : index
    %17 = vector.load %arg8[%c0_9, %c0_10] : memref<8x256xf32, #tpu.memory_space<vmem>>, vector<8x256xf32>
    %c0_11 = arith.constant 0 : index
    %c0_12 = arith.constant 0 : index
    %18 = vector.load %arg5[%c0_11, %c0_12] : memref<256x256xf32, #tpu.memory_space<vmem>>, vector<256x256xf32>
    %cst_13 = arith.constant dense<0.000000e+00> : vector<8x256xf32>
    %19 = tpu.matmul %16, %18, %cst_13 {dimension_numbers = #tpu.dot_dimension_numbers<[1], [1], [0], [0], [0, 0, 1, 0], [], []>} : vector<8x256xf32>, vector<256x256xf32>, vector<8x256xf32> -> vector<8x256xf32>
    %20 = arith.addf %17, %19 : vector<8x256xf32>
    %c0_14 = arith.constant 0 : index
    %c0_15 = arith.constant 0 : index
    %21 = vector.load %arg8[%c0_14, %c0_15] : memref<8x256xf32, #tpu.memory_space<vmem>>, vector<8x256xf32>
    tpu.vector_store %arg8[%c0_14, %c0_15], %20 {strides = array<i32>} : memref<8x256xf32, #tpu.memory_space<vmem>>, vector<8x256xf32>,
    %c0_i32_16 = arith.constant 0 : i32
    %22 = arith.cmpi eq, %arg1, %c0_i32_16 : i32
    %23 = arith.extui %22 : i1 to i32
    %c0_i32_17 = arith.constant 0 : i32
    %24 = arith.cmpi ne, %23, %c0_i32_17 : i32
    scf.if %24 {
      %c0_18 = arith.constant 0 : index
      %c0_19 = arith.constant 0 : index
      %25 = vector.load %arg8[%c0_18, %c0_19] : memref<8x256xf32, #tpu.memory_space<vmem>>, vector<8x256xf32>
      %c0_20 = arith.constant 0 : index
      %c0_21 = arith.constant 0 : index
      %26 = vector.load %arg6[%c0_20, %c0_21] : memref<1x256xf32, #tpu.memory_space<vmem>>, vector<1x256xf32>
      %27 = vector.broadcast %26 : vector<1x256xf32> to vector<8x256xf32>
      %28 = arith.addf %25, %27 : vector<8x256xf32>
      %c0_22 = arith.constant 0 : index
      %c0_23 = arith.constant 0 : index
      %29 = vector.load %arg7[%c0_22, %c0_23] : memref<8x256xf32, #tpu.memory_space<vmem>>, vector<8x256xf32>
      tpu.vector_store %arg7[%c0_22, %c0_23], %28 {strides = array<i32>} : memref<8x256xf32, #tpu.memory_space<vmem>>, vector<8x256xf32>,
    } else {
    }
    return
  }
  func.func @transform_0(%arg0: i32, %arg1: i32) -> (i32, i32) {
    %c0_i32 = arith.constant 0 : i32
    %c0_i32_0 = arith.constant 0 : i32
    return %arg0, %c0_i32 : i32, i32
  }
  func.func @transform_1(%arg0: i32, %arg1: i32) -> (i32, i32) {
    %c0_i32 = arith.constant 0 : i32
    %c0_i32_0 = arith.constant 0 : i32
    return %arg1, %c0_i32 : i32, i32
  }
  func.func @transform_2(%arg0: i32, %arg1: i32) -> (i32, i32) {
    %c0_i32 = arith.constant 0 : i32
    %c0_i32_0 = arith.constant 0 : i32
    return %c0_i32, %arg1 : i32, i32
  }
  func.func @transform_3(%arg0: i32, %arg1: i32) -> (i32, i32) {
    %c0_i32 = arith.constant 0 : i32
    %c0_i32_0 = arith.constant 0 : i32
    return %c0_i32, %arg1 : i32, i32
  }
  func.func @transform_4(%arg0: i32, %arg1: i32) -> (i32, i32) {
    %c0_i32 = arith.constant 0 : i32
    %c0_i32_0 = arith.constant 0 : i32
    %c0_i32_1 = arith.constant 0 : i32
    return %c0_i32, %c0_i32_0 : i32, i32
  }
  func.func @transform_5(%arg0: i32, %arg1: i32) -> (i32, i32) {
    %c0_i32 = arith.constant 0 : i32
    %c0_i32_0 = arith.constant 0 : i32
    return %arg0, %c0_i32 : i32, i32
  }
}

</mosaic_0001>

<llo_original>
// kernel: tpu_custom_call.1
$region0: #{tpu_custom_call.1}
  #allocation0 [shape = 'u32[]', space=smem, size = 0x4, offset = 0x4, fixed_abs, tag = 'smem constant byte address 0x4 - core index']
  #allocation1 [shape = 'u32[144,128]{1,0:T(1,128)}', space=vmem, size = 0x12000, scoped, tag = 'internal scratch']
  #allocation2 [shape = 'f32[8,256]{1,0:T(8,128)}', space=vmem, size = 0x2000, scoped, tag = 'scratch operand']
  %s0 = inlined_call_operand.hbm [shape: f32[16,256], index: 0, kind: input, shape index: {}]
  %s1 = inlined_call_operand.hbm [shape: f32[256,256], index: 1, kind: input, shape index: {}]
  %s2 = inlined_call_operand.hbm [shape: f32[1,256], index: 2, kind: input, shape index: {}]
  %s3 = inlined_call_operand.hbm [shape: f32[256,256], index: 3, kind: input, shape index: {}]
  %s4 = inlined_call_operand.hbm [shape: f32[1,256], index: 4, kind: input, shape index: {}]
  %s5 = inlined_call_operand.hbm [shape: f32[16,256], index: 5, kind: output, shape index: {}]
  %s6 = sld [smem:[#allocation0]]
  $region81: #{tpu_custom_call.1} parent=0
    _
  %s8 = ssub.s32 1, %s6
  %s9 = scalar_select 0, %s8, %s6
  $region1: #{tpu_custom_call.1} parent=0
    #allocation3 [shape = 'u8[16384]{0}', space=vmem, size = 0x4000, scoped, tag = 'input window, operand 0']
    #allocation4 [shape = 's32[2]{0}', space=sflag, size = 0x8, scoped, tag = 'scoped memory for tpu_custom_call.1']
    #allocation5 [shape = 's32[2]{0}', space=sflag, size = 0x8, scoped, tag = 'scoped memory for tpu_custom_call.1']
    #allocation6 [shape = 'u8[262144]{0}', space=vmem, size = 0x40000, scoped, tag = 'input window, operand 1, single buffered']
    #allocation7 [shape = 's32[1]{0}', space=sflag, size = 0x4, scoped, tag = 'scoped memory for tpu_custom_call.1']
    #allocation8 [shape = 'u8[1024]{0}', space=vmem, size = 0x400, scoped, tag = 'input window, operand 2, single buffered']
    #allocation9 [shape = 'u8[262144]{0}', space=vmem, size = 0x40000, scoped, tag = 'input window, operand 3, single buffered']
    #allocation10 [shape = 's32[1]{0}', space=sflag, size = 0x4, scoped, tag = 'scoped memory for tpu_custom_call.1']
    #allocation11 [shape = 'u8[1024]{0}', space=vmem, size = 0x400, scoped, tag = 'input window, operand 4, single buffered']
    #allocation12 [shape = 'u8[16384]{0}', space=vmem, size = 0x4000, scoped, tag = 'output window, operand 0']
    %10 = vsyncpa [#allocation4], 0
    %s11 = scalar_lea.sflag [#allocation4], 1
    %12 = vsyncpa %s11, 0
    %13 = vsyncpa [#allocation7], 0
    %14 = vsyncpa [#allocation10], 0
    %15 = vsyncpa [#allocation5], 0
    %s16 = scalar_lea.sflag [#allocation5], 1
    %17 = vsyncpa %s16, 0
    loop: start=0, step=1, limit=4
    $region2: #{tpu_custom_call.1} parent=1 // loop_pre_header
      _
    $region3: #{tpu_custom_call.1} parent=1 // loop_header
      %s19 = sphi 0, %s23
      %p20 = scmp.ge.s32.totalorder %s19, 4
      %s26 = sphi 0, %s38
      %s27 = sphi 0, %s34
      %s28 = sphi 0, %s26
      %s29 = sphi 0, %s27
      %s30 = sphi 0, %s28
      %s31 = sphi 0, %s29
      %s41 = sphi 0, %s43
      %s44 = sphi 0, %s41
      %s45 = sphi 0, %s44
      %s61 = sphi 0, %s45
      %s67 = sphi 0, %s69
      %s70 = sphi 0, %s67
      %s71 = sphi 0, %s70
      %s87 = sphi 0, %s71
      %s93 = sphi 0, %s95
      %s96 = sphi 0, %s93
      %s97 = sphi 0, %s96
      %s113 = sphi 0, %s97
      %s119 = sphi 0, %s121
      %s122 = sphi 0, %s119
      %s123 = sphi 0, %s122
      %s139 = sphi 0, %s123
      %s143 = sphi 0, %s143
      %s145 = sphi 0, %s143
      %s146 = sphi 0, %s145
      %s160 = sphi 0, %s146
      %s166 = sphi 0, %s168
      %s169 = sphi 0, %s166
      %s170 = sphi 0, %s169
      %s186 = sphi 0, %s170
    $region4: #{tpu_custom_call.1} parent=1 // loop_header_branch
      %22 = sbr.rel (%p20) target = $region8
    $region5: #{tpu_custom_call.1} parent=1 // loop_body
      %s24 = ssub.s32 %s19, 1
      %s25 = ssub.s32 %s19, 2
      %s32 = sadd.s32 1, %s27
      %p33 = scmp.ge.s32.totalorder %s32, 1
      %s34 = scalar_select %p33, 0, %s32
      %s35 = sadd.s32 1, %s26
      %s36 = scalar_select %p33, %s35, %s26
      %p37 = scmp.ge.s32.totalorder %s36, 2
      %s38 = scalar_select %p37, 0, %s36
      %s39 = ssub.s32 %s26, %s38
      %p40 = scmp.eq.s32.totalorder %s39, 0
      %s42 = sadd.s32 %s41, 1
      %s43 = scalar_select %p40, %s41, %s42
      %p46 = pneg %p40
      %p47 = scmp.eq.s32.totalorder %s19, 1
      %p48 = por %p46, %p47
      %p49 = scmp.ne.s32.totalorder %s41, %s44
      %p50 = scmp.eq.s32.totalorder %s19, 0
      %p51 = por %p49, %p50
      %p52 = scmp.ne.s32.totalorder %s41, %s44
      %p53 = scmp.eq.s32.totalorder %s24, 1
      %p54 = por %p52, %p53
      %p55 = scmp.ne.s32.totalorder %s44, %s45
      %p56 = scmp.eq.s32.totalorder %s24, 0
      %p57 = por %p55, %p56
      %p58 = scmp.ne.s32.totalorder %s44, %s45
      %p59 = scmp.eq.s32.totalorder %s25, 1
      %p60 = por %p58, %p59
      %p62 = scmp.ne.s32.totalorder %s45, %s61
      %p63 = scmp.eq.s32.totalorder %s25, 0
      %p64 = por %p62, %p63
      %s65 = ssub.s32 %s27, %s34
      %p66 = scmp.eq.s32.totalorder %s65, 0
      %s68 = sadd.s32 %s67, 1
      %s69 = scalar_select %p66, %s67, %s68
      %p72 = pneg %p66
      %p73 = scmp.eq.s32.totalorder %s19, 1
      %p74 = por %p72, %p73
      %p75 = scmp.ne.s32.totalorder %s67, %s70
      %p76 = scmp.eq.s32.totalorder %s19, 0
      %p77 = por %p75, %p76
      %p78 = scmp.ne.s32.totalorder %s67, %s70
      %p79 = scmp.eq.s32.totalorder %s24, 1
      %p80 = por %p78, %p79
      %p81 = scmp.ne.s32.totalorder %s70, %s71
      %p82 = scmp.eq.s32.totalorder %s24, 0
      %p83 = por %p81, %p82
      %p84 = scmp.ne.s32.totalorder %s70, %s71
      %p85 = scmp.eq.s32.totalorder %s25, 1
      %p86 = por %p84, %p85
      %p88 = scmp.ne.s32.totalorder %s71, %s87
      %p89 = scmp.eq.s32.totalorder %s25, 0
      %p90 = por %p88, %p89
      %s91 = ssub.s32 %s27, %s34
      %p92 = scmp.eq.s32.totalorder %s91, 0
      %s94 = sadd.s32 %s93, 1
      %s95 = scalar_select %p92, %s93, %s94
      %p98 = pneg %p92
      %p99 = scmp.eq.s32.totalorder %s19, 1
      %p100 = por %p98, %p99
      %p101 = scmp.ne.s32.totalorder %s93, %s96
      %p102 = scmp.eq.s32.totalorder %s19, 0
      %p103 = por %p101, %p102
      %p104 = scmp.ne.s32.totalorder %s93, %s96
      %p105 = scmp.eq.s32.totalorder %s24, 1
      %p106 = por %p104, %p105
      %p107 = scmp.ne.s32.totalorder %s96, %s97
      %p108 = scmp.eq.s32.totalorder %s24, 0
      %p109 = por %p107, %p108
      %p110 = scmp.ne.s32.totalorder %s96, %s97
      %p111 = scmp.eq.s32.totalorder %s25, 1
      %p112 = por %p110, %p111
      %p114 = scmp.ne.s32.totalorder %s97, %s113
      %p115 = scmp.eq.s32.totalorder %s25, 0
      %p116 = por %p114, %p115
      %s117 = ssub.s32 %s27, %s34
      %p118 = scmp.eq.s32.totalorder %s117, 0
      %s120 = sadd.s32 %s119, 1
      %s121 = scalar_select %p118, %s119, %s120
      %p124 = pneg %p118
      %p125 = scmp.eq.s32.totalorder %s19, 1
      %p126 = por %p124, %p125
      %p127 = scmp.ne.s32.totalorder %s119, %s122
      %p128 = scmp.eq.s32.totalorder %s19, 0
      %p129 = por %p127, %p128
      %p130 = scmp.ne.s32.totalorder %s119, %s122
      %p131 = scmp.eq.s32.totalorder %s24, 1
      %p132 = por %p130, %p131
      %p133 = scmp.ne.s32.totalorder %s122, %s123
      %p134 = scmp.eq.s32.totalorder %s24, 0
      %p135 = por %p133, %p134
      %p136 = scmp.ne.s32.totalorder %s122, %s123
      %p137 = scmp.eq.s32.totalorder %s25, 1
      %p138 = por %p136, %p137
      %p140 = scmp.ne.s32.totalorder %s123, %s139
      %p141 = scmp.eq.s32.totalorder %s25, 0
      %p142 = por %p140, %p141
      %s144 = sadd.s32 %s143, 1
      %p147 = scmp.eq.s32.totalorder %s19, 1
      %p148 = scmp.ne.s32.totalorder %s143, %s145
      %p149 = scmp.eq.s32.totalorder %s19, 0
      %p150 = por %p148, %p149
      %p151 = scmp.ne.s32.totalorder %s143, %s145
      %p152 = scmp.eq.s32.totalorder %s24, 1
      %p153 = por %p151, %p152
      %p154 = scmp.ne.s32.totalorder %s145, %s146
      %p155 = scmp.eq.s32.totalorder %s24, 0
      %p156 = por %p154, %p155
      %p157 = scmp.ne.s32.totalorder %s145, %s146
      %p158 = scmp.eq.s32.totalorder %s25, 1
      %p159 = por %p157, %p158
      %p161 = scmp.ne.s32.totalorder %s146, %s160
      %p162 = scmp.eq.s32.totalorder %s25, 0
      %p163 = por %p161, %p162
      %s164 = ssub.s32 %s26, %s38
      %p165 = scmp.eq.s32.totalorder %s164, 0
      %s167 = sadd.s32 %s166, 1
      %s168 = scalar_select %p165, %s166, %s167
      %p171 = pneg %p165
      %p172 = scmp.eq.s32.totalorder %s19, 1
      %p173 = por %p171, %p172
      %p174 = scmp.ne.s32.totalorder %s166, %s169
      %p175 = scmp.eq.s32.totalorder %s19, 0
      %p176 = por %p174, %p175
      %p177 = scmp.ne.s32.totalorder %s166, %s169
      %p178 = scmp.eq.s32.totalorder %s24, 1
      %p179 = por %p177, %p178
      %p180 = scmp.ne.s32.totalorder %s169, %s170
      %p181 = scmp.eq.s32.totalorder %s24, 0
      %p182 = por %p180, %p181
      %p183 = scmp.ne.s32.totalorder %s169, %s170
      %p184 = scmp.eq.s32.totalorder %s25, 1
      %p185 = por %p183, %p184
      %p187 = scmp.ne.s32.totalorder %s170, %s186
      %p188 = scmp.eq.s32.totalorder %s25, 0
      %p189 = por %p187, %p188
      %p190 = scmp.le.s32.totalorder 1, %s19
      %p191 = scmp.lt.s32.totalorder %s19, 3
      %p192 = pnand %p190, %p191
      %p193 = pneg %p192
      // Predicated region
      $region9: #{tpu_custom_call.1} parent=5 // pred_check
        _
      $region10: #{tpu_custom_call.1} parent=5 // pred_check_branch
        %195 = sbr.rel (%p192) target = $region12
      $region11: #{tpu_custom_call.1} parent=5 // pred_region
        %s196 = ssub.s32 %s19, 1
        // Predicated region
        $region13: #{tpu_custom_call.1} parent=11 // pred_check
          %p197 = pneg %p83
        $region14: #{tpu_custom_call.1} parent=11 // pred_check_branch
          %199 = sbr.rel (%p197) target = $region16
        $region15: #{tpu_custom_call.1} parent=11 // pred_region
          %s200 = smul.u32 32, %s29
          %s202 = ssub.s32 8192, 8192
          %203 = vsyncadd [#allocation7], %s202
          %s204 = smul.addr %s200, 2
          %s205 = smul.addr %s204, 128
          %s206 = scalar_lea.hbm %s1, %s205
          %s207 = sshll.u32 [#allocation6], 4
          %s208 = int_to_ptr.vmem [resolvable:$true] %s207
          %213 = dma.hbm_to_vmem [thread:$0]  %s206, 8192, %s208, [#allocation7], 256, 256, 16
        $region16: #{tpu_custom_call.1} parent=11 // pred_fallthru
          _
        // Predicated region
        $region17: #{tpu_custom_call.1} parent=11 // pred_check
          %p214 = pneg %p109
        $region18: #{tpu_custom_call.1} parent=11 // pred_check_branch
          %216 = sbr.rel (%p214) target = $region20
        $region19: #{tpu_custom_call.1} parent=11 // pred_region
          %s217 = smul.u32 2, %s29
          %s219 = ssub.s32 32, 32
          %220 = vsyncadd [#allocation7], %s219
          %s221 = smul.addr %s217, 16
          %s222 = scalar_lea.hbm %s2, %s221
          %s224 = sshll.u32 [#allocation8], 4
          %s225 = int_to_ptr.vmem [resolvable:$true] %s224
          %227 = dma.hbm_to_vmem [thread:$0]  %s222, 32, %s225, [#allocation7]
        $region20: #{tpu_custom_call.1} parent=11 // pred_fallthru
          _
        // Predicated region
        $region21: #{tpu_custom_call.1} parent=11 // pred_check
          %p228 = pneg %p135
        $region22: #{tpu_custom_call.1} parent=11 // pred_check_branch
          %230 = sbr.rel (%p228) target = $region24
        $region23: #{tpu_custom_call.1} parent=11 // pred_region
          %s231 = smul.u32 2, %s29
          %s233 = ssub.s32 8192, 8192
          %234 = vsyncadd [#allocation10], %s233
          %s235 = smul.addr %s231, 128
          %s236 = scalar_lea.hbm %s3, %s235
          %s237 = sshll.u32 [#allocation9], 4
          %s238 = int_to_ptr.vmem [resolvable:$true] %s237
          %243 = dma.hbm_to_vmem [thread:$0]  %s236, 8192, %s238, [#allocation10], 256, 256, 16
        $region24: #{tpu_custom_call.1} parent=11 // pred_fallthru
          _
        // Predicated region
        $region25: #{tpu_custom_call.1} parent=11 // pred_check
          %p244 = pneg %p156
        $region26: #{tpu_custom_call.1} parent=11 // pred_check_branch
          %246 = sbr.rel (%p244) target = $region28
        $region27: #{tpu_custom_call.1} parent=11 // pred_region
          %s248 = ssub.s32 32, 32
          %249 = vsyncadd [#allocation10], %s248
          %s251 = sshll.u32 [#allocation11], 4
          %s252 = int_to_ptr.vmem [resolvable:$true] %s251
          %254 = dma.hbm_to_vmem [thread:$0]  %s4, 32, %s252, [#allocation10]
        $region28: #{tpu_custom_call.1} parent=11 // pred_fallthru
          _
      $region12: #{tpu_custom_call.1} parent=5 // pred_fallthru
        _
      %p255 = scmp.lt.s32.totalorder %s19, 2
      // Predicated region
      $region29: #{tpu_custom_call.1} parent=5 // pred_check
        %p256 = pneg %p255
      $region30: #{tpu_custom_call.1} parent=5 // pred_check_branch
        %258 = sbr.rel (%p256) target = $region32
      $region31: #{tpu_custom_call.1} parent=5 // pred_region
        // Predicated region
        $region33: #{tpu_custom_call.1} parent=31 // pred_check
          %p259 = pneg %p51
        $region34: #{tpu_custom_call.1} parent=31 // pred_check_branch
          %261 = sbr.rel (%p259) target = $region36
        $region35: #{tpu_custom_call.1} parent=31 // pred_region
          %s262 = sand.u32 %s41, 1
          %s263 = scalar_lea.sflag [#allocation4], %s262
          %s264 = sand.u32 %s41, 1
          %s265 = smul.addr %s264, 16
          %s266 = scalar_lea.vmem [#allocation3], %s265
          %s268 = ssub.s32 256, 256
          %269 = vsyncadd %s263, %s268
          %s270 = smul.addr %s26, 2
          %s271 = smul.addr %s270, 128
          %s272 = scalar_lea.hbm %s0, %s271
          %s274 = sshll.u32 %s266, 4
          %s275 = int_to_ptr.vmem [resolvable:$true] %s274
          %277 = dma.hbm_to_vmem [thread:$0]  %s272, 256, %s275, %s263
        $region36: #{tpu_custom_call.1} parent=31 // pred_fallthru
          _
      $region32: #{tpu_custom_call.1} parent=5 // pred_fallthru
        _
      %p278 = scmp.le.s32.totalorder 1, %s19
      %p279 = scmp.lt.s32.totalorder %s19, 3
      %p280 = pnand %p278, %p279
      %p281 = pneg %p280
      // Predicated region
      $region37: #{tpu_custom_call.1} parent=5 // pred_check
        _
      $region38: #{tpu_custom_call.1} parent=5 // pred_check_branch
        %283 = sbr.rel (%p280) target = $region40
      $region39: #{tpu_custom_call.1} parent=5 // pred_region
        %s284 = ssub.s32 %s19, 1
        %s285 = sand.u32 %s44, 1
        %s286 = scalar_lea.sflag [#allocation4], %s285
        %s287 = sand.u32 %s44, 1
        %s288 = smul.addr %s287, 16
        %s289 = scalar_lea.vmem [#allocation3], %s288
        // Predicated region
        $region41: #{tpu_custom_call.1} parent=39 // pred_check
          %p290 = pneg %p57
        $region42: #{tpu_custom_call.1} parent=39 // pred_check_branch
          %292 = sbr.rel (%p290) target = $region44
        $region43: #{tpu_custom_call.1} parent=39 // pred_region
          %293 = dma.done %s286, 256
        $region44: #{tpu_custom_call.1} parent=39 // pred_fallthru
          _
        // Predicated region
        $region45: #{tpu_custom_call.1} parent=39 // pred_check
          %p294 = pneg %p83
        $region46: #{tpu_custom_call.1} parent=39 // pred_check_branch
          %296 = sbr.rel (%p294) target = $region48
        $region47: #{tpu_custom_call.1} parent=39 // pred_region
          %297 = dma.done [#allocation7], 8192
        $region48: #{tpu_custom_call.1} parent=39 // pred_fallthru
          _
        // Predicated region
        $region49: #{tpu_custom_call.1} parent=39 // pred_check
          %p298 = pneg %p109
        $region50: #{tpu_custom_call.1} parent=39 // pred_check_branch
          %300 = sbr.rel (%p298) target = $region52
        $region51: #{tpu_custom_call.1} parent=39 // pred_region
          %301 = dma.done [#allocation7], 32
        $region52: #{tpu_custom_call.1} parent=39 // pred_fallthru
          _
        // Predicated region
        $region53: #{tpu_custom_call.1} parent=39 // pred_check
          %p302 = pneg %p135
        $region54: #{tpu_custom_call.1} parent=39 // pred_check_branch
          %304 = sbr.rel (%p302) target = $region56
        $region55: #{tpu_custom_call.1} parent=39 // pred_region
          %305 = dma.done [#allocation10], 8192
        $region56: #{tpu_custom_call.1} parent=39 // pred_fallthru
          _
        // Predicated region
        $region57: #{tpu_custom_call.1} parent=39 // pred_check
          %p306 = pneg %p156
        $region58: #{tpu_custom_call.1} parent=39 // pred_check_branch
          %308 = sbr.rel (%p306) target = $region60
        $region59: #{tpu_custom_call.1} parent=39 // pred_region
          %309 = dma.done [#allocation10], 32
        $region60: #{tpu_custom_call.1} parent=39 // pred_fallthru
          _
        %s310 = sand.u32 %s44, 1
        %s311 = scalar_lea.sflag [#allocation4], %s310
        %s312 = sand.u32 %s44, 1
        %s313 = smul.addr %s312, 16
        %s314 = scalar_lea.vmem [#allocation3], %s313
        %p315 = pneg %p57
        %p316 = pneg %p54
        %p317 = pneg %p83
        %p318 = pneg %p80
        %p319 = pneg %p109
        %p320 = pneg %p106
        %p321 = pneg %p135
        %p322 = pneg %p132
        %p323 = pneg %p156
        %p324 = pneg %p153
        %p325 = pneg %p182
        %p326 = pneg %p179
        %s327 = sand.u32 %s169, 1
        %s328 = scalar_lea.sflag [#allocation5], %s327
        %s329 = sand.u32 %s169, 1
        %s330 = smul.addr %s329, 16
        %s331 = scalar_lea.vmem [#allocation12], %s330
        %s332 = smul.u32 32, %s29
        %s333 = smul.u32 2, %s29
        %s334 = smul.u32 2, %s29
        %p335 = scmp.eq.s32.totalorder %s29, 0
        // Predicated region
        $region61: #{tpu_custom_call.1} parent=39 // pred_check
          %p336 = pneg %p335
        $region62: #{tpu_custom_call.1} parent=39 // pred_check_branch
          %338 = sbr.rel (%p336) target = $region64
        $region63: #{tpu_custom_call.1} parent=39 // pred_region
          %339 = vst [vmem:[#allocation2] sm:$0xff] 0.0
          %340 = vst [vmem:[#allocation2 + $0x8] sm:$0xff] 0.0
        $region64: #{tpu_custom_call.1} parent=39 // pred_fallthru
          _
        %v341 = vld [vmem:[%s289] sm:$0xff]
        %v342 = vld [vmem:[%s289 + $0x8] sm:$0xff]
        %v343 = vld [vmem:[#allocation6] sm:$0xff]
        %v344 = vld [vmem:[#allocation6 + $0x8] sm:$0xff]
        %v345 = vld [vmem:[#allocation6 + $0x10] sm:$0xff]
        %v346 = vld [vmem:[#allocation6 + $0x18] sm:$0xff]
        %v347 = vld [vmem:[#allocation6 + $0x20] sm:$0xff]
        %v348 = vld [vmem:[#allocation6 + $0x28] sm:$0xff]
        %v349 = vld [vmem:[#allocation6 + $0x30] sm:$0xff]
        %v350 = vld [vmem:[#allocation6 + $0x38] sm:$0xff]
        %v351 = vld [vmem:[#allocation6 + $0x40] sm:$0xff]
        %v352 = vld [vmem:[#allocation6 + $0x48] sm:$0xff]
        %v353 = vld [vmem:[#allocation6 + $0x50] sm:$0xff]
        %v354 = vld [vmem:[#allocation6 + $0x58] sm:$0xff]
        %v355 = vld [vmem:[#allocation6 + $0x60] sm:$0xff]
        %v356 = vld [vmem:[#allocation6 + $0x68] sm:$0xff]
        %v357 = vld [vmem:[#allocation6 + $0x70] sm:$0xff]
        %v358 = vld [vmem:[#allocation6 + $0x78] sm:$0xff]
        %v359 = vld [vmem:[#allocation6 + $0x80] sm:$0xff]
        %v360 = vld [vmem:[#allocation6 + $0x88] sm:$0xff]
        %v361 = vld [vmem:[#allocation6 + $0x90] sm:$0xff]
        %v362 = vld [vmem:[#allocation6 + $0x98] sm:$0xff]
        %v363 = vld [vmem:[#allocation6 + $0xa0] sm:$0xff]
        %v364 = vld [vmem:[#allocation6 + $0xa8] sm:$0xff]
        %v365 = vld [vmem:[#allocation6 + $0xb0] sm:$0xff]
        %v366 = vld [vmem:[#allocation6 + $0xb8] sm:$0xff]
        %v367 = vld [vmem:[#allocation6 + $0xc0] sm:$0xff]
        %v368 = vld [vmem:[#allocation6 + $0xc8] sm:$0xff]
        %v369 = vld [vmem:[#allocation6 + $0xd0] sm:$0xff]
        %v370 = vld [vmem:[#allocation6 + $0xd8] sm:$0xff]
        %v371 = vld [vmem:[#allocation6 + $0xe0] sm:$0xff]
        %v372 = vld [vmem:[#allocation6 + $0xe8] sm:$0xff]
        %v373 = vld [vmem:[#allocation6 + $0xf0] sm:$0xff]
        %v374 = vld [vmem:[#allocation6 + $0xf8] sm:$0xff]
        %v375 = vld [vmem:[#allocation6 + $0x100] sm:$0xff]
        %v376 = vld [vmem:[#allocation6 + $0x108] sm:$0xff]
        %v377 = vld [vmem:[#allocation6 + $0x110] sm:$0xff]
        %v378 = vld [vmem:[#allocation6 + $0x118] sm:$0xff]
        %v379 = vld [vmem:[#allocation6 + $0x120] sm:$0xff]
        %v380 = vld [vmem:[#allocation6 + $0x128] sm:$0xff]
        %v381 = vld [vmem:[#allocation6 + $0x130] sm:$0xff]
        %v382 = vld [vmem:[#allocation6 + $0x138] sm:$0xff]
        %v383 = vld [vmem:[#allocation6 + $0x140] sm:$0xff]
        %v384 = vld [vmem:[#allocation6 + $0x148] sm:$0xff]
        %v385 = vld [vmem:[#allocation6 + $0x150] sm:$0xff]
        %v386 = vld [vmem:[#allocation6 + $0x158] sm:$0xff]
        %v387 = vld [vmem:[#allocation6 + $0x160] sm:$0xff]
        %v388 = vld [vmem:[#allocation6 + $0x168] sm:$0xff]
        %v389 = vld [vmem:[#allocation6 + $0x170] sm:$0xff]
        %v390 = vld [vmem:[#allocation6 + $0x178] sm:$0xff]
        %v391 = vld [vmem:[#allocation6 + $0x180] sm:$0xff]
        %v392 = vld [vmem:[#allocation6 + $0x188] sm:$0xff]
        %v393 = vld [vmem:[#allocation6 + $0x190] sm:$0xff]
        %v394 = vld [vmem:[#allocation6 + $0x198] sm:$0xff]
        %v395 = vld [vmem:[#allocation6 + $0x1a0] sm:$0xff]
        %v396 = vld [vmem:[#allocation6 + $0x1a8] sm:$0xff]
        %v397 = vld [vmem:[#allocation6 + $0x1b0] sm:$0xff]
        %v398 = vld [vmem:[#allocation6 + $0x1b8] sm:$0xff]
        %v399 = vld [vmem:[#allocation6 + $0x1c0] sm:$0xff]
        %v400 = vld [vmem:[#allocation6 + $0x1c8] sm:$0xff]
        %v401 = vld [vmem:[#allocation6 + $0x1d0] sm:$0xff]
        %v402 = vld [vmem:[#allocation6 + $0x1d8] sm:$0xff]
        %v403 = vld [vmem:[#allocation6 + $0x1e0] sm:$0xff]
        %v404 = vld [vmem:[#allocation6 + $0x1e8] sm:$0xff]
        %v405 = vld [vmem:[#allocation6 + $0x1f0] sm:$0xff]
        %v406 = vld [vmem:[#allocation6 + $0x1f8] sm:$0xff]
        %v407 = vld [vmem:[#allocation8] sm:$0x3]
        %v409 = vlaneseq
        %v410 = vshrl.u32 %v409, 7
        %v411 = vsub.s32 0, %v410
        %v412 = vrot.slane %v407, %v411
        %v413 = vlaneseq
        %v414 = vshrl.u32 %v413, 7
        %v415 = vsub.s32 1, %v414
        %v416 = vrot.slane %v407, %v415
        %419 = vmatprep.subr.mxu0 %v344
        %420 = vmatpush1.xpose.msra.mxu0 %v343
        %421 = vmatprep.subr.mxu0 %v346
        %422 = vmatpush1.xpose.msra.mxu0 %v345
        %423 = vmatprep.subr.mxu0 %v348
        %424 = vmatpush1.xpose.msra.mxu0 %v347
        %425 = vmatprep.subr.mxu0 %v350
        %426 = vmatpush1.xpose.msra.mxu0 %v349
        %427 = vmatprep.subr.mxu0 %v352
        %428 = vmatpush1.xpose.msra.mxu0 %v351
        %429 = vmatprep.subr.mxu0 %v354
        %430 = vmatpush1.xpose.msra.mxu0 %v353
        %431 = vmatprep.subr.mxu0 %v356
        %432 = vmatpush1.xpose.msra.mxu0 %v355
        %433 = vmatprep.subr.mxu0 %v358
        %434 = vmatpush1.xpose.msra.mxu0 %v357
        %435 = vmatprep.subr.mxu0 %v360
        %436 = vmatpush1.xpose.msra.mxu0 %v359
        %437 = vmatprep.subr.mxu0 %v362
        %438 = vmatpush1.xpose.msra.mxu0 %v361
        %439 = vmatprep.subr.mxu0 %v364
        %440 = vmatpush1.xpose.msra.mxu0 %v363
        %441 = vmatprep.subr.mxu0 %v366
        %442 = vmatpush1.xpose.msra.mxu0 %v365
        %443 = vmatprep.subr.mxu0 %v368
        %444 = vmatpush1.xpose.msra.mxu0 %v367
        %445 = vmatprep.subr.mxu0 %v370
        %446 = vmatpush1.xpose.msra.mxu0 %v369
        %447 = vmatprep.subr.mxu0 %v372
        %448 = vmatpush1.xpose.msra.mxu0 %v371
        %449 = vmatprep.subr.mxu0 %v374
        %450 = vmatpush1.xpose.msra.mxu0 %v373
        %451 = vmatprep.subr.mxu0 %v376
        %452 = vmatpush1.xpose.msra.mxu0 %v375
        %453 = vmatprep.subr.mxu0 %v378
        %454 = vmatpush1.xpose.msra.mxu0 %v377
        %455 = vmatprep.subr.mxu0 %v380
        %456 = vmatpush1.xpose.msra.mxu0 %v379
        %457 = vmatprep.subr.mxu0 %v382
        %458 = vmatpush1.xpose.msra.mxu0 %v381
        %459 = vmatprep.subr.mxu0 %v384
        %460 = vmatpush1.xpose.msra.mxu0 %v383
        %461 = vmatprep.subr.mxu0 %v386
        %462 = vmatpush1.xpose.msra.mxu0 %v385
        %463 = vmatprep.subr.mxu0 %v388
        %464 = vmatpush1.xpose.msra.mxu0 %v387
        %465 = vmatprep.subr.mxu0 %v390
        %466 = vmatpush1.xpose.msra.mxu0 %v389
        %467 = vmatprep.subr.mxu0 %v392
        %468 = vmatpush1.xpose.msra.mxu0 %v391
        %469 = vmatprep.subr.mxu0 %v394
        %470 = vmatpush1.xpose.msra.mxu0 %v393
        %471 = vmatprep.subr.mxu0 %v396
        %472 = vmatpush1.xpose.msra.mxu0 %v395
        %473 = vmatprep.subr.mxu0 %v398
        %474 = vmatpush1.xpose.msra.mxu0 %v397
        %475 = vmatprep.subr.mxu0 %v400
        %476 = vmatpush1.xpose.msra.mxu0 %v399
        %477 = vmatprep.subr.mxu0 %v402
        %478 = vmatpush1.xpose.msra.mxu0 %v401
        %479 = vmatprep.subr.mxu0 %v404
        %480 = vmatpush1.xpose.msra.mxu0 %v403
        %481 = vmatprep.subr.mxu0 %v406
        %482 = vmatpush1.xpose.msra.mxu0 %v405
        %483 = vmatprep.mubr.f32.mxu0 %v342
        %484 = vmatmul.mubr.f32.gmra.mrb[0].mxu0 %v341
        %v485 = vpop.f32.mrb[0].mxu0
        %v486 = vadd.f32 %v412, %v485
        %v487 = vpop.f32.mrb[0].mxu0
        %v488 = vadd.f32 %v416, %v487
        %489 = vdwg.mxu0
        %v490 = vmul.f32 %v486, 0.5
        %v491 = vmul.f32 %v488, 0.5
        %v492 = vmul.f32 %v486, 0.70710677
        %v493 = vmul.f32 %v488, 0.70710677
        %v494 = verf.f32.pop %v492
        %v495 = verf.f32.pop %v493
        %v496 = vadd.f32 %v494, 1.0
        %v497 = vadd.f32 %v495, 1.0
        %v498 = vmul.f32 %v490, %v496
        %v499 = vmul.f32 %v491, %v497
        %v500 = vld [vmem:[#allocation2] sm:$0xff]
        %v501 = vld [vmem:[#allocation2 + $0x8] sm:$0xff]
        %v502 = vld [vmem:[#allocation9] sm:$0xff]
        %v503 = vld [vmem:[#allocation9 + $0x8] sm:$0xff]
        %v504 = vld [vmem:[#allocation9 + $0x10] sm:$0xff]
        %v505 = vld [vmem:[#allocation9 + $0x18] sm:$0xff]
        %v506 = vld [vmem:[#allocation9 + $0x20] sm:$0xff]
        %v507 = vld [vmem:[#allocation9 + $0x28] sm:$0xff]
        %v508 = vld [vmem:[#allocation9 + $0x30] sm:$0xff]
        %v509 = vld [vmem:[#allocation9 + $0x38] sm:$0xff]
        %v510 = vld [vmem:[#allocation9 + $0x40] sm:$0xff]
        %v511 = vld [vmem:[#allocation9 + $0x48] sm:$0xff]
        %v512 = vld [vmem:[#allocation9 + $0x50] sm:$0xff]
        %v513 = vld [vmem:[#allocation9 + $0x58] sm:$0xff]
        %v514 = vld [vmem:[#allocation9 + $0x60] sm:$0xff]
        %v515 = vld [vmem:[#allocation9 + $0x68] sm:$0xff]
        %v516 = vld [vmem:[#allocation9 + $0x70] sm:$0xff]
        %v517 = vld [vmem:[#allocation9 + $0x78] sm:$0xff]
        %v518 = vld [vmem:[#allocation9 + $0x80] sm:$0xff]
        %v519 = vld [vmem:[#allocation9 + $0x88] sm:$0xff]
        %v520 = vld [vmem:[#allocation9 + $0x90] sm:$0xff]
        %v521 = vld [vmem:[#allocation9 + $0x98] sm:$0xff]
        %v522 = vld [vmem:[#allocation9 + $0xa0] sm:$0xff]
        %v523 = vld [vmem:[#allocation9 + $0xa8] sm:$0xff]
        %v524 = vld [vmem:[#allocation9 + $0xb0] sm:$0xff]
        %v525 = vld [vmem:[#allocation9 + $0xb8] sm:$0xff]
        %v526 = vld [vmem:[#allocation9 + $0xc0] sm:$0xff]
        %v527 = vld [vmem:[#allocation9 + $0xc8] sm:$0xff]
        %v528 = vld [vmem:[#allocation9 + $0xd0] sm:$0xff]
        %v529 = vld [vmem:[#allocation9 + $0xd8] sm:$0xff]
        %v530 = vld [vmem:[#allocation9 + $0xe0] sm:$0xff]
        %v531 = vld [vmem:[#allocation9 + $0xe8] sm:$0xff]
        %v532 = vld [vmem:[#allocation9 + $0xf0] sm:$0xff]
        %v533 = vld [vmem:[#allocation9 + $0xf8] sm:$0xff]
        %v534 = vld [vmem:[#allocation9 + $0x100] sm:$0xff]
        %v535 = vld [vmem:[#allocation9 + $0x108] sm:$0xff]
        %v536 = vld [vmem:[#allocation9 + $0x110] sm:$0xff]
        %v537 = vld [vmem:[#allocation9 + $0x118] sm:$0xff]
        %v538 = vld [vmem:[#allocation9 + $0x120] sm:$0xff]
        %v539 = vld [vmem:[#allocation9 + $0x128] sm:$0xff]
        %v540 = vld [vmem:[#allocation9 + $0x130] sm:$0xff]
        %v541 = vld [vmem:[#allocation9 + $0x138] sm:$0xff]
        %v542 = vld [vmem:[#allocation9 + $0x140] sm:$0xff]
        %v543 = vld [vmem:[#allocation9 + $0x148] sm:$0xff]
        %v544 = vld [vmem:[#allocation9 + $0x150] sm:$0xff]
        %v545 = vld [vmem:[#allocation9 + $0x158] sm:$0xff]
        %v546 = vld [vmem:[#allocation9 + $0x160] sm:$0xff]
        %v547 = vld [vmem:[#allocation9 + $0x168] sm:$0xff]
        %v548 = vld [vmem:[#allocation9 + $0x170] sm:$0xff]
        %v549 = vld [vmem:[#allocation9 + $0x178] sm:$0xff]
        %v550 = vld [vmem:[#allocation9 + $0x180] sm:$0xff]
        %v551 = vld [vmem:[#allocation9 + $0x188] sm:$0xff]
        %v552 = vld [vmem:[#allocation9 + $0x190] sm:$0xff]
        %v553 = vld [vmem:[#allocation9 + $0x198] sm:$0xff]
        %v554 = vld [vmem:[#allocation9 + $0x1a0] sm:$0xff]
        %v555 = vld [vmem:[#allocation9 + $0x1a8] sm:$0xff]
        %v556 = vld [vmem:[#allocation9 + $0x1b0] sm:$0xff]
        %v557 = vld [vmem:[#allocation9 + $0x1b8] sm:$0xff]
        %v558 = vld [vmem:[#allocation9 + $0x1c0] sm:$0xff]
        %v559 = vld [vmem:[#allocation9 + $0x1c8] sm:$0xff]
        %v560 = vld [vmem:[#allocation9 + $0x1d0] sm:$0xff]
        %v561 = vld [vmem:[#allocation9 + $0x1d8] sm:$0xff]
        %v562 = vld [vmem:[#allocation9 + $0x1e0] sm:$0xff]
        %v563 = vld [vmem:[#allocation9 + $0x1e8] sm:$0xff]
        %v564 = vld [vmem:[#allocation9 + $0x1f0] sm:$0xff]
        %v565 = vld [vmem:[#allocation9 + $0x1f8] sm:$0xff]
        %566 = vmatprep.subr.mxu0 %v503
        %567 = vmatpush1.xpose.msra.mxu0 %v502
        %568 = vmatprep.subr.mxu0 %v505
        %569 = vmatpush1.xpose.msra.mxu0 %v504
        %570 = vmatprep.subr.mxu0 %v507
        %571 = vmatpush1.xpose.msra.mxu0 %v506
        %572 = vmatprep.subr.mxu0 %v509
        %573 = vmatpush1.xpose.msra.mxu0 %v508
        %574 = vmatprep.subr.mxu0 %v511
        %575 = vmatpush1.xpose.msra.mxu0 %v510
        %576 = vmatprep.subr.mxu0 %v513
        %577 = vmatpush1.xpose.msra.mxu0 %v512
        %578 = vmatprep.subr.mxu0 %v515
        %579 = vmatpush1.xpose.msra.mxu0 %v514
        %580 = vmatprep.subr.mxu0 %v517
        %581 = vmatpush1.xpose.msra.mxu0 %v516
        %582 = vmatprep.subr.mxu0 %v519
        %583 = vmatpush1.xpose.msra.mxu0 %v518
        %584 = vmatprep.subr.mxu0 %v521
        %585 = vmatpush1.xpose.msra.mxu0 %v520
        %586 = vmatprep.subr.mxu0 %v523
        %587 = vmatpush1.xpose.msra.mxu0 %v522
        %588 = vmatprep.subr.mxu0 %v525
        %589 = vmatpush1.xpose.msra.mxu0 %v524
        %590 = vmatprep.subr.mxu0 %v527
        %591 = vmatpush1.xpose.msra.mxu0 %v526
        %592 = vmatprep.subr.mxu0 %v529
        %593 = vmatpush1.xpose.msra.mxu0 %v528
        %594 = vmatprep.subr.mxu0 %v531
        %595 = vmatpush1.xpose.msra.mxu0 %v530
        %596 = vmatprep.subr.mxu0 %v533
        %597 = vmatpush1.xpose.msra.mxu0 %v532
        %598 = vmatprep.subr.mxu0 %v535
        %599 = vmatpush1.xpose.msra.mxu0 %v534
        %600 = vmatprep.subr.mxu0 %v537
        %601 = vmatpush1.xpose.msra.mxu0 %v536
        %602 = vmatprep.subr.mxu0 %v539
        %603 = vmatpush1.xpose.msra.mxu0 %v538
        %604 = vmatprep.subr.mxu0 %v541
        %605 = vmatpush1.xpose.msra.mxu0 %v540
        %606 = vmatprep.subr.mxu0 %v543
        %607 = vmatpush1.xpose.msra.mxu0 %v542
        %608 = vmatprep.subr.mxu0 %v545
        %609 = vmatpush1.xpose.msra.mxu0 %v544
        %610 = vmatprep.subr.mxu0 %v547
        %611 = vmatpush1.xpose.msra.mxu0 %v546
        %612 = vmatprep.subr.mxu0 %v549
        %613 = vmatpush1.xpose.msra.mxu0 %v548
        %614 = vmatprep.subr.mxu0 %v551
        %615 = vmatpush1.xpose.msra.mxu0 %v550
        %616 = vmatprep.subr.mxu0 %v553
        %617 = vmatpush1.xpose.msra.mxu0 %v552
        %618 = vmatprep.subr.mxu0 %v555
        %619 = vmatpush1.xpose.msra.mxu0 %v554
        %620 = vmatprep.subr.mxu0 %v557
        %621 = vmatpush1.xpose.msra.mxu0 %v556
        %622 = vmatprep.subr.mxu0 %v559
        %623 = vmatpush1.xpose.msra.mxu0 %v558
        %624 = vmatprep.subr.mxu0 %v561
        %625 = vmatpush1.xpose.msra.mxu0 %v560
        %626 = vmatprep.subr.mxu0 %v563
        %627 = vmatpush1.xpose.msra.mxu0 %v562
        %628 = vmatprep.subr.mxu0 %v565
        %629 = vmatpush1.xpose.msra.mxu0 %v564
        %630 = vmatprep.mubr.f32.mxu0 %v499
        %631 = vmatmul.mubr.f32.gmra.mrb[0].mxu0 %v498
        %v632 = vpop.f32.mrb[0].mxu0
        %v633 = vadd.f32 0.0, %v632
        %v634 = vpop.f32.mrb[0].mxu0
        %v635 = vadd.f32 0.0, %v634
        %636 = vdwg.mxu0
        %v637 = vadd.f32 %v500, %v633
        %v638 = vadd.f32 %v501, %v635
        %639 = vst [vmem:[#allocation2] sm:$0xff] %v637
        %640 = vst [vmem:[#allocation2 + $0x8] sm:$0xff] %v638
        // Predicated region
        $region65: #{tpu_custom_call.1} parent=39 // pred_check
          %p641 = pneg %p335
        $region66: #{tpu_custom_call.1} parent=39 // pred_check_branch
          %643 = sbr.rel (%p641) target = $region68
        $region67: #{tpu_custom_call.1} parent=39 // pred_region
          %v644 = vld [vmem:[#allocation2] sm:$0xff]
          %v645 = vld [vmem:[#allocation2 + $0x8] sm:$0xff]
          %v646 = vld [vmem:[#allocation11] sm:$0x3]
          %v648 = vlaneseq
          %v649 = vshrl.u32 %v648, 7
          %v650 = vsub.s32 0, %v649
          %v651 = vrot.slane %v646, %v650
          %v652 = vlaneseq
          %v653 = vshrl.u32 %v652, 7
          %v654 = vsub.s32 1, %v653
          %v655 = vrot.slane %v646, %v654
          %v658 = vadd.f32 %v644, %v651
          %v659 = vadd.f32 %v645, %v655
          %660 = vst [vmem:[%s331] sm:$0xff] %v658
          %661 = vst [vmem:[%s331 + $0x8] sm:$0xff] %v659
        $region68: #{tpu_custom_call.1} parent=39 // pred_fallthru
          _
        %s662 = sand.u32 %s169, 1
        %s663 = scalar_lea.sflag [#allocation5], %s662
        %s664 = sand.u32 %s169, 1
        %s665 = smul.addr %s664, 16
        %s666 = scalar_lea.vmem [#allocation12], %s665
        // Predicated region
        $region69: #{tpu_custom_call.1} parent=39 // pred_check
          %p667 = pneg %p179
        $region70: #{tpu_custom_call.1} parent=39 // pred_check_branch
          %669 = sbr.rel (%p667) target = $region72
        $region71: #{tpu_custom_call.1} parent=39 // pred_region
          %s671 = ssub.s32 256, 256
          %672 = vsyncadd %s663, %s671
          %s673 = smul.addr %s28, 2
          %s674 = smul.addr %s673, 128
          %s675 = scalar_lea.hbm %s5, %s674
          %s677 = sshll.u32 %s666, 4
          %s678 = int_to_ptr.vmem [resolvable:$true] %s677
          %680 = dma.vmem_to_hbm [thread:$0]  %s678, 256, %s675, %s663
        $region72: #{tpu_custom_call.1} parent=39 // pred_fallthru
          _
      $region40: #{tpu_custom_call.1} parent=5 // pred_fallthru
        _
      %p681 = scmp.le.s32.totalorder 2, %s19
      // Predicated region
      $region73: #{tpu_custom_call.1} parent=5 // pred_check
        %p682 = pneg %p681
      $region74: #{tpu_custom_call.1} parent=5 // pred_check_branch
        %684 = sbr.rel (%p682) target = $region76
      $region75: #{tpu_custom_call.1} parent=5 // pred_region
        %s685 = ssub.s32 %s19, 2
        // Predicated region
        $region77: #{tpu_custom_call.1} parent=75 // pred_check
          %p686 = pneg %p185
        $region78: #{tpu_custom_call.1} parent=75 // pred_check_branch
          %688 = sbr.rel (%p686) target = $region80
        $region79: #{tpu_custom_call.1} parent=75 // pred_region
          %s689 = sand.u32 %s170, 1
          %s690 = scalar_lea.sflag [#allocation5], %s689
          %s691 = sand.u32 %s170, 1
          %s692 = smul.addr %s691, 16
          %s693 = scalar_lea.vmem [#allocation12], %s692
          %694 = dma.done %s690, 256
        $region80: #{tpu_custom_call.1} parent=75 // pred_fallthru
          _
      $region76: #{tpu_custom_call.1} parent=5 // pred_fallthru
        _
    $region6: #{tpu_custom_call.1} parent=1 // loop_footer
      %s23 = sadd.s32 1, %s19
    $region7: #{tpu_custom_call.1} parent=1 // loop_footer_branch
      %18 = sbr.rel target = $region3
    $region8: #{tpu_custom_call.1} parent=1 // loop_exit
      _
    %695 = vsyncpa [#allocation4], 1
    %s696 = scalar_lea.sflag [#allocation4], 1
    %697 = vsyncpa %s696, 1
    %698 = vsyncpa [#allocation7], 1
    %699 = vsyncpa [#allocation10], 1
    %700 = vsyncpa [#allocation5], 1
    %s701 = scalar_lea.sflag [#allocation5], 1
    %702 = vsyncpa %s701, 1

</llo_original>
